<compile_context>
chip_gen: v5e
topology: v5e:2x2
jax: 0.10.0
libtpu: 0.0.40
codegen_flags: <defaults>
</compile_context>

<pallas_src>
import jax
import jax.numpy as jnp
from jax.experimental import pallas as pl
from jax.experimental.pallas import tpu as pltpu


def charrnn_kernel(x_ref, h0_ref, wih_ref, whh_ref, b_ref, wout_ref, bout_ref,
                   out_ref, hN_ref, h_hist):
    Bp, T, H = h_hist.shape

    # (1) Batched input projection: ONE (Bp*T, I) @ (I, H) matmul, both biases folded in.
    #     Rows are batch-major (row = b*T + t), matching PyTorch's final reshape order.
    xproj = (jnp.dot(x_ref[...], wih_ref[...], preferred_element_type=jnp.float32)
             + b_ref[...])                       # (Bp*T, H)
    xproj = xproj.reshape(Bp, T, H)              # tile-aligned regrouping (layout no-op)

    whh = whh_ref[...]                           # (H, H), resident in vregs
    h = h0_ref[...].astype(jnp.float32)          # (Bp, H) carried hidden state

    # (2) Time recurrence, fully unrolled (T is small & static).  Only the small
    #     h @ W_hh^T matmul + tanh remain on the serial dependence chain.
    for t in range(T):
        h = jnp.tanh(xproj[:, t, :]
                     + jnp.dot(h, whh, preferred_element_type=jnp.float32))
        h_hist[:, t, :] = h                      # history store, off the critical path

    hN_ref[...] = h.astype(hN_ref.dtype)

    # (3) Batched output Linear over all Bp*T hidden states + one slab store.
    h_all = h_hist[...].reshape(Bp * T, H)
    logits = (jnp.dot(h_all, wout_ref[...], preferred_element_type=jnp.float32)
              + bout_ref[...])                   # (Bp*T, V)
    out_ref[...] = logits.astype(out_ref.dtype)


def char_rnn_forward(x, h0, params):
    """x: (B, T, I) batch_first, h0: (1, B, H).  Returns (out (B*T, V), hidden (1, B, H))."""
    wih, whh, bih, bhh, wout, bout = params
    B, T, I = x.shape
    H = wih.shape[0]
    V = wout.shape[0]

    # Pad batch to the f32 sublane height (8): full vregs / full MXU rows.
    Bp = max(8, ((B + 7) // 8) * 8)
    if Bp != B:
        x_p = jnp.pad(x, ((0, Bp - B), (0, 0), (0, 0)))
        h0_p = jnp.pad(h0[0], ((0, Bp - B), (0, 0)))
    else:
        x_p = x
        h0_p = h0[0]

    x2d = x_p.reshape(Bp * T, I)            # contiguous merge -> rows ordered b*T + t

    # Pre-transpose weights for row-major MXU matmuls; fold the two biases together.
    wih_t = wih.T                           # (I, H)
    whh_t = whh.T                           # (H, H)
    wout_t = wout.T                         # (H, V)
    b_comb = (bih + bhh).reshape(1, H)      # single combined bias add (once, not per step)
    bout2 = bout.reshape(1, V)

    full2 = lambda i: (0, 0)

    cost = pl.CostEstimate(
        flops=2 * Bp * T * (I * H + H * H + H * V),
        transcendentals=Bp * T * H,
        bytes_accessed=4 * (Bp * T * I + Bp * H + I * H + H * H + H + H * V + V
                            + Bp * T * V + Bp * H),
    )

    out_p, hN_p = pl.pallas_call(
        charrnn_kernel,
        out_shape=(jax.ShapeDtypeStruct((Bp * T, V), x.dtype),
                   jax.ShapeDtypeStruct((Bp, H), x.dtype)),
        grid_spec=pltpu.PrefetchScalarGridSpec(
            num_scalar_prefetch=0,
            grid=(1,),                                   # single invocation
            in_specs=[
                pl.BlockSpec((Bp * T, I), full2),        # x, flattened batch-major
                pl.BlockSpec((Bp, H), full2),            # h0
                pl.BlockSpec((I, H), full2),             # W_ih^T
                pl.BlockSpec((H, H), full2),             # W_hh^T
                pl.BlockSpec((1, H), full2),             # b_ih + b_hh
                pl.BlockSpec((H, V), full2),             # W_lin^T
                pl.BlockSpec((1, V), full2),             # b_lin
            ],
            out_specs=[
                pl.BlockSpec((Bp * T, V), full2),        # logits, single slab
                pl.BlockSpec((Bp, H), full2),            # final hidden state
            ],
            scratch_shapes=[pltpu.VMEM((Bp, T, H), jnp.float32)],
        ),
        compiler_params=pltpu.CompilerParams(
            dimension_semantics=("arbitrary",)),
        cost_estimate=cost,
    )(x2d, h0_p, wih_t, whh_t, b_comb, wout_t, bout2)

    out = out_p[:B * T]                     # drop padded batches; already PyTorch order
    hidden = hN_p[:B][None]                 # (1, B, H)
    return out, hidden


def init_params(key, input_size, hidden_size):
    # PyTorch nn.RNN / nn.Linear default init: U(-1/sqrt(H), 1/sqrt(H))
    k = 1.0 / jnp.sqrt(hidden_size)
    keys = jax.random.split(key, 6)
    wih = jax.random.uniform(keys[0], (hidden_size, input_size), jnp.float32, -k, k)
    whh = jax.random.uniform(keys[1], (hidden_size, hidden_size), jnp.float32, -k, k)
    bih = jax.random.uniform(keys[2], (hidden_size,), jnp.float32, -k, k)
    bhh = jax.random.uniform(keys[3], (hidden_size,), jnp.float32, -k, k)
    wout = jax.random.uniform(keys[4], (input_size, hidden_size), jnp.float32, -k, k)
    bout = jax.random.uniform(keys[5], (input_size,), jnp.float32, -k, k)
    return wih, whh, bih, bhh, wout, bout


def reference_forward(x, h0, params):
    """Pure-JAX reference (mirrors PyTorch semantics)."""
    wih, whh, bih, bhh, wout, bout = params
    B, T, I = x.shape
    h = h0[0]
    outs = []
    for t in range(T):
        h = jnp.tanh(x[:, t, :] @ wih.T + bih + h @ whh.T + bhh)
        outs.append(h)
    rnn_out = jnp.stack(outs, axis=1)                      # (B, T, H)
    out = rnn_out.reshape(B * T, -1) @ wout.T + bout       # (B*T, V)
    return out, h[None]


if __name__ == "__main__":
    B, T, I, H = 4, 8, 16, 32

    key = jax.random.PRNGKey(0)
    k_x, k_p = jax.random.split(key)
    x = jax.random.normal(k_x, (B, T, I), dtype=jnp.float32)
    h0 = jnp.zeros((1, B, H), dtype=jnp.float32)           # CharRNN.init_hidden
    params = init_params(k_p, I, H)

    forward = jax.jit(char_rnn_forward)
    out, h_last = jax.block_until_ready(forward(x, h0, params))

    ref_out, ref_h = reference_forward(x, h0, params)
    assert out.shape == (B * T, I) and h_last.shape == (1, B, H)
    assert jnp.allclose(out, ref_out, atol=1e-5, rtol=1e-5)
    assert jnp.allclose(h_last, ref_h, atol=1e-5, rtol=1e-5)

    print("KERNEL_OK")
</pallas_src>

<mosaic_0001>
module attributes {stable_mosaic.version = 11 : i64} {
  func.func @charrnn_kernel(%arg0: i32, %arg1: memref<64x16xf32, #tpu.memory_space<vmem>>, %arg2: memref<8x32xf32, #tpu.memory_space<vmem>>, %arg3: memref<16x32xf32, #tpu.memory_space<vmem>>, %arg4: memref<32x32xf32, #tpu.memory_space<vmem>>, %arg5: memref<1x32xf32, #tpu.memory_space<vmem>>, %arg6: memref<32x16xf32, #tpu.memory_space<vmem>>, %arg7: memref<1x16xf32, #tpu.memory_space<vmem>>, %arg8: memref<64x16xf32, #tpu.memory_space<vmem>>, %arg9: memref<8x32xf32, #tpu.memory_space<vmem>>, %arg10: memref<8x8x32xf32, #tpu.memory_space<vmem>>) attributes {dimension_semantics = [#tpu.dimension_semantics<arbitrary>], iteration_bounds = array<i64: 1>, scalar_prefetch = 0 : i64, scratch_operands = 1 : i64, tpu.core_type = #tpu.core_type<tc>, window_params = [{pipeline_mode = #tpu.pipeline_mode<synchronous>, transform_indices = @transform_0, window_bounds = array<i64: 64, 16>}, {pipeline_mode = #tpu.pipeline_mode<synchronous>, transform_indices = @transform_1, window_bounds = array<i64: 8, 32>}, {pipeline_mode = #tpu.pipeline_mode<synchronous>, transform_indices = @transform_2, window_bounds = array<i64: 16, 32>}, {pipeline_mode = #tpu.pipeline_mode<synchronous>, transform_indices = @transform_3, window_bounds = array<i64: 32, 32>}, {pipeline_mode = #tpu.pipeline_mode<synchronous>, transform_indices = @transform_4, window_bounds = array<i64: 1, 32>}, {pipeline_mode = #tpu.pipeline_mode<synchronous>, transform_indices = @transform_5, window_bounds = array<i64: 32, 16>}, {pipeline_mode = #tpu.pipeline_mode<synchronous>, transform_indices = @transform_6, window_bounds = array<i64: 1, 16>}, {pipeline_mode = #tpu.pipeline_mode<synchronous>, transform_indices = @transform_7, window_bounds = array<i64: 64, 16>}, {pipeline_mode = #tpu.pipeline_mode<synchronous>, transform_indices = @transform_8, window_bounds = array<i64: 8, 32>}]} {
    %c0 = arith.constant 0 : index
    %c0_0 = arith.constant 0 : index
    %0 = vector.load %arg1[%c0, %c0_0] : memref<64x16xf32, #tpu.memory_space<vmem>>, vector<64x16xf32>
    %c0_1 = arith.constant 0 : index
    %c0_2 = arith.constant 0 : index
    %1 = vector.load %arg3[%c0_1, %c0_2] : memref<16x32xf32, #tpu.memory_space<vmem>>, vector<16x32xf32>
    %cst = arith.constant dense<0.000000e+00> : vector<64x32xf32>
    %2 = tpu.matmul %0, %1, %cst {dimension_numbers = #tpu.dot_dimension_numbers<[1], [0], [0], [1], [0, 0, 1, 1], [], []>} : vector<64x16xf32>, vector<16x32xf32>, vector<64x32xf32> -> vector<64x32xf32>
    %c0_3 = arith.constant 0 : index
    %c0_4 = arith.constant 0 : index
    %3 = vector.load %arg5[%c0_3, %c0_4] : memref<1x32xf32, #tpu.memory_space<vmem>>, vector<1x32xf32>
    %4 = vector.broadcast %3 : vector<1x32xf32> to vector<64x32xf32>
    %5 = arith.addf %2, %4 : vector<64x32xf32>
    %6 = vector.shape_cast %5 : vector<64x32xf32> to vector<8x8x32xf32>
    %c0_5 = arith.constant 0 : index
    %c0_6 = arith.constant 0 : index
    %7 = vector.load %arg4[%c0_5, %c0_6] : memref<32x32xf32, #tpu.memory_space<vmem>>, vector<32x32xf32>
    %c0_7 = arith.constant 0 : index
    %c0_8 = arith.constant 0 : index
    %8 = vector.load %arg2[%c0_7, %c0_8] : memref<8x32xf32, #tpu.memory_space<vmem>>, vector<8x32xf32>
    %9 = vector.extract_strided_slice %6 {offsets = [0, 0, 0], sizes = [8, 1, 32], strides = [1, 1, 1]} : vector<8x8x32xf32> to vector<8x1x32xf32>
    %10 = vector.shape_cast %9 : vector<8x1x32xf32> to vector<8x32xf32>
    %cst_9 = arith.constant dense<0.000000e+00> : vector<8x32xf32>
    %11 = tpu.matmul %8, %7, %cst_9 {dimension_numbers = #tpu.dot_dimension_numbers<[1], [0], [0], [1], [0, 0, 1, 1], [], []>} : vector<8x32xf32>, vector<32x32xf32>, vector<8x32xf32> -> vector<8x32xf32>
    %12 = arith.addf %10, %11 : vector<8x32xf32>
    %13 = math.tanh %12 : vector<8x32xf32>
    %c0_10 = arith.constant 0 : index
    %c0_11 = arith.constant 0 : index
    %c0_12 = arith.constant 0 : index
    %14 = vector.load %arg10[%c0_10, %c0_11, %c0_12] : memref<8x8x32xf32, #tpu.memory_space<vmem>>, vector<8x1x32xf32>
    %15 = vector.shape_cast %14 : vector<8x1x32xf32> to vector<8x32xf32>
    %16 = vector.shape_cast %13 : vector<8x32xf32> to vector<8x1x32xf32>
    tpu.vector_store %arg10[%c0_10, %c0_11, %c0_12], %16 {strides = array<i32>} : memref<8x8x32xf32, #tpu.memory_space<vmem>>, vector<8x1x32xf32>,
    %17 = vector.extract_strided_slice %6 {offsets = [0, 1, 0], sizes = [8, 1, 32], strides = [1, 1, 1]} : vector<8x8x32xf32> to vector<8x1x32xf32>
    %18 = vector.shape_cast %17 : vector<8x1x32xf32> to vector<8x32xf32>
    %cst_13 = arith.constant dense<0.000000e+00> : vector<8x32xf32>
    %19 = tpu.matmul %13, %7, %cst_13 {dimension_numbers = #tpu.dot_dimension_numbers<[1], [0], [0], [1], [0, 0, 1, 1], [], []>} : vector<8x32xf32>, vector<32x32xf32>, vector<8x32xf32> -> vector<8x32xf32>
    %20 = arith.addf %18, %19 : vector<8x32xf32>
    %21 = math.tanh %20 : vector<8x32xf32>
    %c0_14 = arith.constant 0 : index
    %c1 = arith.constant 1 : index
    %c0_15 = arith.constant 0 : index
    %22 = vector.load %arg10[%c0_14, %c1, %c0_15] : memref<8x8x32xf32, #tpu.memory_space<vmem>>, vector<8x1x32xf32>
    %23 = vector.shape_cast %22 : vector<8x1x32xf32> to vector<8x32xf32>
    %24 = vector.shape_cast %21 : vector<8x32xf32> to vector<8x1x32xf32>
    tpu.vector_store %arg10[%c0_14, %c1, %c0_15], %24 {strides = array<i32>} : memref<8x8x32xf32, #tpu.memory_space<vmem>>, vector<8x1x32xf32>,
    %25 = vector.extract_strided_slice %6 {offsets = [0, 2, 0], sizes = [8, 1, 32], strides = [1, 1, 1]} : vector<8x8x32xf32> to vector<8x1x32xf32>
    %26 = vector.shape_cast %25 : vector<8x1x32xf32> to vector<8x32xf32>
    %cst_16 = arith.constant dense<0.000000e+00> : vector<8x32xf32>
    %27 = tpu.matmul %21, %7, %cst_16 {dimension_numbers = #tpu.dot_dimension_numbers<[1], [0], [0], [1], [0, 0, 1, 1], [], []>} : vector<8x32xf32>, vector<32x32xf32>, vector<8x32xf32> -> vector<8x32xf32>
    %28 = arith.addf %26, %27 : vector<8x32xf32>
    %29 = math.tanh %28 : vector<8x32xf32>
    %c0_17 = arith.constant 0 : index
    %c2 = arith.constant 2 : index
    %c0_18 = arith.constant 0 : index
    %30 = vector.load %arg10[%c0_17, %c2, %c0_18] : memref<8x8x32xf32, #tpu.memory_space<vmem>>, vector<8x1x32xf32>
    %31 = vector.shape_cast %30 : vector<8x1x32xf32> to vector<8x32xf32>
    %32 = vector.shape_cast %29 : vector<8x32xf32> to vector<8x1x32xf32>
    tpu.vector_store %arg10[%c0_17, %c2, %c0_18], %32 {strides = array<i32>} : memref<8x8x32xf32, #tpu.memory_space<vmem>>, vector<8x1x32xf32>,
    %33 = vector.extract_strided_slice %6 {offsets = [0, 3, 0], sizes = [8, 1, 32], strides = [1, 1, 1]} : vector<8x8x32xf32> to vector<8x1x32xf32>
    %34 = vector.shape_cast %33 : vector<8x1x32xf32> to vector<8x32xf32>
    %cst_19 = arith.constant dense<0.000000e+00> : vector<8x32xf32>
    %35 = tpu.matmul %29, %7, %cst_19 {dimension_numbers = #tpu.dot_dimension_numbers<[1], [0], [0], [1], [0, 0, 1, 1], [], []>} : vector<8x32xf32>, vector<32x32xf32>, vector<8x32xf32> -> vector<8x32xf32>
    %36 = arith.addf %34, %35 : vector<8x32xf32>
    %37 = math.tanh %36 : vector<8x32xf32>
    %c0_20 = arith.constant 0 : index
    %c3 = arith.constant 3 : index
    %c0_21 = arith.constant 0 : index
    %38 = vector.load %arg10[%c0_20, %c3, %c0_21] : memref<8x8x32xf32, #tpu.memory_space<vmem>>, vector<8x1x32xf32>
    %39 = vector.shape_cast %38 : vector<8x1x32xf32> to vector<8x32xf32>
    %40 = vector.shape_cast %37 : vector<8x32xf32> to vector<8x1x32xf32>
    tpu.vector_store %arg10[%c0_20, %c3, %c0_21], %40 {strides = array<i32>} : memref<8x8x32xf32, #tpu.memory_space<vmem>>, vector<8x1x32xf32>,
    %41 = vector.extract_strided_slice %6 {offsets = [0, 4, 0], sizes = [8, 1, 32], strides = [1, 1, 1]} : vector<8x8x32xf32> to vector<8x1x32xf32>
    %42 = vector.shape_cast %41 : vector<8x1x32xf32> to vector<8x32xf32>
    %cst_22 = arith.constant dense<0.000000e+00> : vector<8x32xf32>
    %43 = tpu.matmul %37, %7, %cst_22 {dimension_numbers = #tpu.dot_dimension_numbers<[1], [0], [0], [1], [0, 0, 1, 1], [], []>} : vector<8x32xf32>, vector<32x32xf32>, vector<8x32xf32> -> vector<8x32xf32>
    %44 = arith.addf %42, %43 : vector<8x32xf32>
    %45 = math.tanh %44 : vector<8x32xf32>
    %c0_23 = arith.constant 0 : index
    %c4 = arith.constant 4 : index
    %c0_24 = arith.constant 0 : index
    %46 = vector.load %arg10[%c0_23, %c4, %c0_24] : memref<8x8x32xf32, #tpu.memory_space<vmem>>, vector<8x1x32xf32>
    %47 = vector.shape_cast %46 : vector<8x1x32xf32> to vector<8x32xf32>
    %48 = vector.shape_cast %45 : vector<8x32xf32> to vector<8x1x32xf32>
    tpu.vector_store %arg10[%c0_23, %c4, %c0_24], %48 {strides = array<i32>} : memref<8x8x32xf32, #tpu.memory_space<vmem>>, vector<8x1x32xf32>,
    %49 = vector.extract_strided_slice %6 {offsets = [0, 5, 0], sizes = [8, 1, 32], strides = [1, 1, 1]} : vector<8x8x32xf32> to vector<8x1x32xf32>
    %50 = vector.shape_cast %49 : vector<8x1x32xf32> to vector<8x32xf32>
    %cst_25 = arith.constant dense<0.000000e+00> : vector<8x32xf32>
    %51 = tpu.matmul %45, %7, %cst_25 {dimension_numbers = #tpu.dot_dimension_numbers<[1], [0], [0], [1], [0, 0, 1, 1], [], []>} : vector<8x32xf32>, vector<32x32xf32>, vector<8x32xf32> -> vector<8x32xf32>
    %52 = arith.addf %50, %51 : vector<8x32xf32>
    %53 = math.tanh %52 : vector<8x32xf32>
    %c0_26 = arith.constant 0 : index
    %c5 = arith.constant 5 : index
    %c0_27 = arith.constant 0 : index
    %54 = vector.load %arg10[%c0_26, %c5, %c0_27] : memref<8x8x32xf32, #tpu.memory_space<vmem>>, vector<8x1x32xf32>
    %55 = vector.shape_cast %54 : vector<8x1x32xf32> to vector<8x32xf32>
    %56 = vector.shape_cast %53 : vector<8x32xf32> to vector<8x1x32xf32>
    tpu.vector_store %arg10[%c0_26, %c5, %c0_27], %56 {strides = array<i32>} : memref<8x8x32xf32, #tpu.memory_space<vmem>>, vector<8x1x32xf32>,
    %57 = vector.extract_strided_slice %6 {offsets = [0, 6, 0], sizes = [8, 1, 32], strides = [1, 1, 1]} : vector<8x8x32xf32> to vector<8x1x32xf32>
    %58 = vector.shape_cast %57 : vector<8x1x32xf32> to vector<8x32xf32>
    %cst_28 = arith.constant dense<0.000000e+00> : vector<8x32xf32>
    %59 = tpu.matmul %53, %7, %cst_28 {dimension_numbers = #tpu.dot_dimension_numbers<[1], [0], [0], [1], [0, 0, 1, 1], [], []>} : vector<8x32xf32>, vector<32x32xf32>, vector<8x32xf32> -> vector<8x32xf32>
    %60 = arith.addf %58, %59 : vector<8x32xf32>
    %61 = math.tanh %60 : vector<8x32xf32>
    %c0_29 = arith.constant 0 : index
    %c6 = arith.constant 6 : index
    %c0_30 = arith.constant 0 : index
    %62 = vector.load %arg10[%c0_29, %c6, %c0_30] : memref<8x8x32xf32, #tpu.memory_space<vmem>>, vector<8x1x32xf32>
    %63 = vector.shape_cast %62 : vector<8x1x32xf32> to vector<8x32xf32>
    %64 = vector.shape_cast %61 : vector<8x32xf32> to vector<8x1x32xf32>
    tpu.vector_store %arg10[%c0_29, %c6, %c0_30], %64 {strides = array<i32>} : memref<8x8x32xf32, #tpu.memory_space<vmem>>, vector<8x1x32xf32>,
    %65 = vector.extract_strided_slice %6 {offsets = [0, 7, 0], sizes = [8, 1, 32], strides = [1, 1, 1]} : vector<8x8x32xf32> to vector<8x1x32xf32>
    %66 = vector.shape_cast %65 : vector<8x1x32xf32> to vector<8x32xf32>
    %cst_31 = arith.constant dense<0.000000e+00> : vector<8x32xf32>
    %67 = tpu.matmul %61, %7, %cst_31 {dimension_numbers = #tpu.dot_dimension_numbers<[1], [0], [0], [1], [0, 0, 1, 1], [], []>} : vector<8x32xf32>, vector<32x32xf32>, vector<8x32xf32> -> vector<8x32xf32>
    %68 = arith.addf %66, %67 : vector<8x32xf32>
    %69 = math.tanh %68 : vector<8x32xf32>
    %c0_32 = arith.constant 0 : index
    %c7 = arith.constant 7 : index
    %c0_33 = arith.constant 0 : index
    %70 = vector.load %arg10[%c0_32, %c7, %c0_33] : memref<8x8x32xf32, #tpu.memory_space<vmem>>, vector<8x1x32xf32>
    %71 = vector.shape_cast %70 : vector<8x1x32xf32> to vector<8x32xf32>
    %72 = vector.shape_cast %69 : vector<8x32xf32> to vector<8x1x32xf32>
    tpu.vector_store %arg10[%c0_32, %c7, %c0_33], %72 {strides = array<i32>} : memref<8x8x32xf32, #tpu.memory_space<vmem>>, vector<8x1x32xf32>,
    %c0_34 = arith.constant 0 : index
    %c0_35 = arith.constant 0 : index
    %73 = vector.load %arg9[%c0_34, %c0_35] : memref<8x32xf32, #tpu.memory_space<vmem>>, vector<8x32xf32>
    tpu.vector_store %arg9[%c0_34, %c0_35], %69 {strides = array<i32>} : memref<8x32xf32, #tpu.memory_space<vmem>>, vector<8x32xf32>,
    %c0_36 = arith.constant 0 : index
    %c0_37 = arith.constant 0 : index
    %c0_38 = arith.constant 0 : index
    %74 = vector.load %arg10[%c0_36, %c0_37, %c0_38] : memref<8x8x32xf32, #tpu.memory_space<vmem>>, vector<8x8x32xf32>
    %75 = vector.shape_cast %74 : vector<8x8x32xf32> to vector<64x32xf32>
    %c0_39 = arith.constant 0 : index
    %c0_40 = arith.constant 0 : index
    %76 = vector.load %arg6[%c0_39, %c0_40] : memref<32x16xf32, #tpu.memory_space<vmem>>, vector<32x16xf32>
    %cst_41 = arith.constant dense<0.000000e+00> : vector<64x16xf32>
    %77 = tpu.matmul %75, %76, %cst_41 {dimension_numbers = #tpu.dot_dimension_numbers<[1], [0], [0], [1], [0, 0, 1, 1], [], []>} : vector<64x32xf32>, vector<32x16xf32>, vector<64x16xf32> -> vector<64x16xf32>
    %c0_42 = arith.constant 0 : index
    %c0_43 = arith.constant 0 : index
    %78 = vector.load %arg7[%c0_42, %c0_43] : memref<1x16xf32, #tpu.memory_space<vmem>>, vector<1x16xf32>
    %79 = vector.broadcast %78 : vector<1x16xf32> to vector<64x16xf32>
    %80 = arith.addf %77, %79 : vector<64x16xf32>
    %c0_44 = arith.constant 0 : index
    %c0_45 = arith.constant 0 : index
    %81 = vector.load %arg8[%c0_44, %c0_45] : memref<64x16xf32, #tpu.memory_space<vmem>>, vector<64x16xf32>
    tpu.vector_store %arg8[%c0_44, %c0_45], %80 {strides = array<i32>} : memref<64x16xf32, #tpu.memory_space<vmem>>, vector<64x16xf32>,
    return
  }
  func.func @transform_0(%arg0: i32) -> (i32, i32) {
    %c0_i32 = arith.constant 0 : i32
    %c0_i32_0 = arith.constant 0 : i32
    %c0_i32_1 = arith.constant 0 : i32
    return %c0_i32, %c0_i32_0 : i32, i32
  }
  func.func @transform_1(%arg0: i32) -> (i32, i32) {
    %c0_i32 = arith.constant 0 : i32
    %c0_i32_0 = arith.constant 0 : i32
    %c0_i32_1 = arith.constant 0 : i32
    return %c0_i32, %c0_i32_0 : i32, i32
  }
  func.func @transform_2(%arg0: i32) -> (i32, i32) {
    %c0_i32 = arith.constant 0 : i32
    %c0_i32_0 = arith.constant 0 : i32
    %c0_i32_1 = arith.constant 0 : i32
    return %c0_i32, %c0_i32_0 : i32, i32
  }
  func.func @transform_3(%arg0: i32) -> (i32, i32) {
    %c0_i32 = arith.constant 0 : i32
    %c0_i32_0 = arith.constant 0 : i32
    %c0_i32_1 = arith.constant 0 : i32
    return %c0_i32, %c0_i32_0 : i32, i32
  }
  func.func @transform_4(%arg0: i32) -> (i32, i32) {
    %c0_i32 = arith.constant 0 : i32
    %c0_i32_0 = arith.constant 0 : i32
    %c0_i32_1 = arith.constant 0 : i32
    return %c0_i32, %c0_i32_0 : i32, i32
  }
  func.func @transform_5(%arg0: i32) -> (i32, i32) {
    %c0_i32 = arith.constant 0 : i32
    %c0_i32_0 = arith.constant 0 : i32
    %c0_i32_1 = arith.constant 0 : i32
    return %c0_i32, %c0_i32_0 : i32, i32
  }
  func.func @transform_6(%arg0: i32) -> (i32, i32) {
    %c0_i32 = arith.constant 0 : i32
    %c0_i32_0 = arith.constant 0 : i32
    %c0_i32_1 = arith.constant 0 : i32
    return %c0_i32, %c0_i32_0 : i32, i32
  }
  func.func @transform_7(%arg0: i32) -> (i32, i32) {
    %c0_i32 = arith.constant 0 : i32
    %c0_i32_0 = arith.constant 0 : i32
    %c0_i32_1 = arith.constant 0 : i32
    return %c0_i32, %c0_i32_0 : i32, i32
  }
  func.func @transform_8(%arg0: i32) -> (i32, i32) {
    %c0_i32 = arith.constant 0 : i32
    %c0_i32_0 = arith.constant 0 : i32
    %c0_i32_1 = arith.constant 0 : i32
    return %c0_i32, %c0_i32_0 : i32, i32
  }
}

</mosaic_0001>

<llo_original>
// kernel: char_rnn_forward.1
$region0: #{char_rnn_forward.1}
  #allocation0 [shape = 'u32[]', space=smem, size = 0x4, offset = 0x4, fixed_abs, tag = 'smem constant byte address 0x4 - core index']
  #allocation1 [shape = 'u32[72,128]{1,0:T(1,128)}', space=vmem, size = 0x9000, scoped, tag = 'internal scratch']
  #allocation2 [shape = 'f32[8,8,32]{2,1,0:T(8,128)}', space=vmem, size = 0x8000, scoped, tag = 'scratch operand']
  %s0 = inlined_call_operand.vmem [shape: f32[64,16], index: 0, kind: input, shape index: {}]
  %s1 = inlined_call_operand.vmem [shape: f32[8,32], index: 1, kind: input, shape index: {}]
  %s2 = inlined_call_operand.vmem [shape: f32[16,32], index: 2, kind: input, shape index: {}]
  %s3 = inlined_call_operand.vmem [shape: f32[32,32], index: 3, kind: input, shape index: {}]
  %s4 = inlined_call_operand.vmem [shape: f32[1,32], index: 4, kind: input, shape index: {}]
  %s5 = inlined_call_operand.vmem [shape: f32[32,16], index: 5, kind: input, shape index: {}]
  %s6 = inlined_call_operand.vmem [shape: f32[1,16], index: 6, kind: input, shape index: {}]
  %s7 = inlined_call_operand.vmem [shape: f32[64,16], index: 7, kind: output, shape index: {0}]
  %s8 = inlined_call_operand.vmem [shape: f32[8,32], index: 8, kind: output, shape index: {1}]
  %9 = xla_tuple %s7, %s8
  %s10 = sld [smem:[#allocation0]]
  $region46: #{char_rnn_forward.1} parent=0
    _
  %s12 = ssub.s32 1, %s10
  %s13 = scalar_select 0, %s12, %s10
  // Predicated region
  $region2: #{char_rnn_forward.1} parent=0 // pred_check
    _
  $region3: #{char_rnn_forward.1} parent=0 // pred_check_branch
    %15 = sbr.rel (0) target = $region5
  $region4: #{char_rnn_forward.1} parent=0 // pred_region
    _
  $region5: #{char_rnn_forward.1} parent=0 // pred_fallthru
    _
  // Predicated region
  $region6: #{char_rnn_forward.1} parent=0 // pred_check
    _
  $region7: #{char_rnn_forward.1} parent=0 // pred_check_branch
    %17 = sbr.rel (0) target = $region9
  $region8: #{char_rnn_forward.1} parent=0 // pred_region
    _
  $region9: #{char_rnn_forward.1} parent=0 // pred_fallthru
    _
  // Predicated region
  $region10: #{char_rnn_forward.1} parent=0 // pred_check
    _
  $region11: #{char_rnn_forward.1} parent=0 // pred_check_branch
    %19 = sbr.rel (0) target = $region13
  $region12: #{char_rnn_forward.1} parent=0 // pred_region
    _
  $region13: #{char_rnn_forward.1} parent=0 // pred_fallthru
    _
  // Predicated region
  $region14: #{char_rnn_forward.1} parent=0 // pred_check
    _
  $region15: #{char_rnn_forward.1} parent=0 // pred_check_branch
    %21 = sbr.rel (0) target = $region17
  $region16: #{char_rnn_forward.1} parent=0 // pred_region
    _
  $region17: #{char_rnn_forward.1} parent=0 // pred_fallthru
    _
  // Predicated region
  $region18: #{char_rnn_forward.1} parent=0 // pred_check
    _
  $region19: #{char_rnn_forward.1} parent=0 // pred_check_branch
    %23 = sbr.rel (0) target = $region21
  $region20: #{char_rnn_forward.1} parent=0 // pred_region
    _
  $region21: #{char_rnn_forward.1} parent=0 // pred_fallthru
    _
  // Predicated region
  $region22: #{char_rnn_forward.1} parent=0 // pred_check
    _
  $region23: #{char_rnn_forward.1} parent=0 // pred_check_branch
    %25 = sbr.rel (0) target = $region25
  $region24: #{char_rnn_forward.1} parent=0 // pred_region
    _
  $region25: #{char_rnn_forward.1} parent=0 // pred_fallthru
    _
  // Predicated region
  $region26: #{char_rnn_forward.1} parent=0 // pred_check
    _
  $region27: #{char_rnn_forward.1} parent=0 // pred_check_branch
    %27 = sbr.rel (0) target = $region29
  $region28: #{char_rnn_forward.1} parent=0 // pred_region
    _
  $region29: #{char_rnn_forward.1} parent=0 // pred_fallthru
    _
  %v28 = vld [vmem:[%s0] sm:$0xff]
  %v29 = vld [vmem:[%s0 + $0x8] sm:$0xff]
  %v30 = vld [vmem:[%s0 + $0x10] sm:$0xff]
  %v31 = vld [vmem:[%s0 + $0x18] sm:$0xff]
  %v32 = vld [vmem:[%s0 + $0x20] sm:$0xff]
  %v33 = vld [vmem:[%s0 + $0x28] sm:$0xff]
  %v34 = vld [vmem:[%s0 + $0x30] sm:$0xff]
  %v35 = vld [vmem:[%s0 + $0x38] sm:$0xff]
  %v36 = vld [vmem:[%s2] sm:$0xff]
  %v37 = vld [vmem:[%s2 + $0x8] sm:$0xff]
  %v38 = vld [vmem:[%s4] sm:$0x1]
  %v40 = vperm.slane %v38, 0
  %vm42 = vcmask 130048
  %v44 = vsel %vm42, %v28, 0
  %v47 = vsel %vm42, %v29, 0
  %v50 = vsel %vm42, %v30, 0
  %v53 = vsel %vm42, %v31, 0
  %v56 = vsel %vm42, %v32, 0
  %v59 = vsel %vm42, %v33, 0
  %v62 = vsel %vm42, %v34, 0
  %v65 = vsel %vm42, %v35, 0
  %67 = vmatpush.msra.mxu0 0.0
  %68 = vmatpush.msra.mxu0 0.0
  %69 = vmatpush.msra.mxu0 0.0
  %70 = vmatpush.msra.mxu0 0.0
  %71 = vmatpush.msra.mxu0 0.0
  %72 = vmatpush.msra.mxu0 0.0
  %73 = vmatpush.msra.mxu0 0.0
  %74 = vmatpush.msra.mxu0 0.0
  %75 = vmatpush.msra.mxu0 0.0
  %76 = vmatpush.msra.mxu0 0.0
  %77 = vmatpush.msra.mxu0 0.0
  %78 = vmatpush.msra.mxu0 0.0
  %79 = vmatpush.msra.mxu0 0.0
  %80 = vmatpush.msra.mxu0 0.0
  %81 = vmatpush.msra.mxu0 %v37
  %82 = vmatpush.msra.mxu0 %v36
  %83 = vmatmul.f32.gmra.mxu0 %v44
  %v84 = vpop.f32.mrf.mxu0
  %v85 = vadd.f32 %v40, %v84
  %86 = vmatmul.f32.gmra.mxu0 %v47
  %v87 = vpop.f32.mrf.mxu0
  %v88 = vadd.f32 %v40, %v87
  %89 = vmatmul.f32.gmra.mxu0 %v50
  %v90 = vpop.f32.mrf.mxu0
  %v91 = vadd.f32 %v40, %v90
  %92 = vmatmul.f32.gmra.mxu0 %v53
  %v93 = vpop.f32.mrf.mxu0
  %v94 = vadd.f32 %v40, %v93
  %95 = vmatmul.f32.gmra.mxu0 %v56
  %v96 = vpop.f32.mrf.mxu0
  %v97 = vadd.f32 %v40, %v96
  %98 = vmatmul.f32.gmra.mxu0 %v59
  %v99 = vpop.f32.mrf.mxu0
  %v100 = vadd.f32 %v40, %v99
  %101 = vmatmul.f32.gmra.mxu0 %v62
  %v102 = vpop.f32.mrf.mxu0
  %v103 = vadd.f32 %v40, %v102
  %104 = vmatmul.f32.gmra.mxu0 %v65
  %v105 = vpop.f32.mrf.mxu0
  %v106 = vadd.f32 %v40, %v105
  %107 = vdwg.mxu0
  %v108 = vld [vmem:[%s3] sm:$0xff]
  %v109 = vld [vmem:[%s3 + $0x8] sm:$0xff]
  %v110 = vld [vmem:[%s3 + $0x10] sm:$0xff]
  %v111 = vld [vmem:[%s3 + $0x18] sm:$0xff]
  %v112 = vld [vmem:[%s1] sm:$0xff]
  %vm113 = vcmask 261120
  %v115 = vsel %vm113, %v112, 0
  %117 = vmatpush.msra.mxu0 0.0
  %118 = vmatpush.msra.mxu0 0.0
  %119 = vmatpush.msra.mxu0 0.0
  %120 = vmatpush.msra.mxu0 0.0
  %121 = vmatpush.msra.mxu0 0.0
  %122 = vmatpush.msra.mxu0 0.0
  %123 = vmatpush.msra.mxu0 0.0
  %124 = vmatpush.msra.mxu0 0.0
  %125 = vmatpush.msra.mxu0 0.0
  %126 = vmatpush.msra.mxu0 0.0
  %127 = vmatpush.msra.mxu0 0.0
  %128 = vmatpush.msra.mxu0 0.0
  %129 = vmatpush.msra.mxu0 %v111
  %130 = vmatpush.msra.mxu0 %v110
  %131 = vmatpush.msra.mxu0 %v109
  %132 = vmatpush.msra.mxu0 %v108
  %133 = vmatmul.f32.gmra.mxu0 %v115
  %v134 = vpop.f32.mrf.mxu0
  %v135 = vadd.f32 0.0, %v134
  %136 = vdwg.mxu0
  %v138 = vrot.slane %v135, 1
  %v139 = vrot.slane %v135, 2
  %v140 = vrot.slane %v135, 3
  %v141 = vrot.slane %v135, 4
  %v142 = vrot.slane %v135, 5
  %v143 = vrot.slane %v135, 6
  %v144 = vrot.slane %v135, 7
  %v153 = vadd.f32 %v85, %v135
  %v154 = vadd.f32 %v88, %v138
  %v155 = vadd.f32 %v91, %v139
  %v156 = vadd.f32 %v94, %v140
  %v157 = vadd.f32 %v97, %v141
  %v158 = vadd.f32 %v100, %v142
  %v159 = vadd.f32 %v103, %v143
  %v160 = vadd.f32 %v106, %v144
  %v161 = vtanh.pop %v153
  %v162 = vtanh.pop %v154
  %v163 = vtanh.pop %v155
  %v164 = vtanh.pop %v156
  %v165 = vtanh.pop %v157
  %v166 = vtanh.pop %v158
  %v167 = vtanh.pop %v159
  %v168 = vtanh.pop %v160
  %vm169 = vcmask 253952
  %170 = vst.msk [vmem:[#allocation2] sm:$0x1] %vm169, %v161
  %171 = vst.msk [vmem:[#allocation2 + $0x8] sm:$0x1] %vm169, %v162
  %172 = vst.msk [vmem:[#allocation2 + $0x10] sm:$0x1] %vm169, %v163
  %173 = vst.msk [vmem:[#allocation2 + $0x18] sm:$0x1] %vm169, %v164
  %174 = vst.msk [vmem:[#allocation2 + $0x20] sm:$0x1] %vm169, %v165
  %175 = vst.msk [vmem:[#allocation2 + $0x28] sm:$0x1] %vm169, %v166
  %176 = vst.msk [vmem:[#allocation2 + $0x30] sm:$0x1] %vm169, %v167
  %177 = vst.msk [vmem:[#allocation2 + $0x38] sm:$0x1] %vm169, %v168
  %v186 = vrot.slane %v162, 7
  %vm187 = vcmask 1041409
  %v188 = vsel %vm187, %v186, %v161
  %v189 = vrot.slane %v163, 6
  %vm190 = vcmask 1042434
  %v191 = vsel %vm190, %v189, %v188
  %v192 = vrot.slane %v164, 5
  %vm193 = vcmask 1043459
  %v194 = vsel %vm193, %v192, %v191
  %v195 = vrot.slane %v165, 4
  %vm196 = vcmask 1044484
  %v197 = vsel %vm196, %v195, %v194
  %v198 = vrot.slane %v166, 3
  %vm199 = vcmask 1045509
  %v200 = vsel %vm199, %v198, %v197
  %v201 = vrot.slane %v167, 2
  %vm202 = vcmask 1046534
  %v203 = vsel %vm202, %v201, %v200
  %v204 = vrot.slane %v168, 1
  %vm205 = vcmask 1047559
  %v206 = vsel %vm205, %v204, %v203
  %v207 = vsel %vm113, %v206, 0
  %209 = vmatpush.msra.mxu0 0.0
  %210 = vmatpush.msra.mxu0 0.0
  %211 = vmatpush.msra.mxu0 0.0
  %212 = vmatpush.msra.mxu0 0.0
  %213 = vmatpush.msra.mxu0 0.0
  %214 = vmatpush.msra.mxu0 0.0
  %215 = vmatpush.msra.mxu0 0.0
  %216 = vmatpush.msra.mxu0 0.0
  %217 = vmatpush.msra.mxu0 0.0
  %218 = vmatpush.msra.mxu0 0.0
  %219 = vmatpush.msra.mxu0 0.0
  %220 = vmatpush.msra.mxu0 0.0
  %221 = vmatpush.msra.mxu0 %v111
  %222 = vmatpush.msra.mxu0 %v110
  %223 = vmatpush.msra.mxu0 %v109
  %224 = vmatpush.msra.mxu0 %v108
  %225 = vmatmul.f32.gmra.mxu0 %v207
  %v226 = vpop.f32.mrf.mxu0
  %v227 = vadd.f32 0.0, %v226
  %228 = vdwg.mxu0
  %v230 = vrot.slane %v227, 7
  %v231 = vrot.slane %v227, 1
  %v232 = vrot.slane %v227, 2
  %v233 = vrot.slane %v227, 3
  %v234 = vrot.slane %v227, 4
  %v235 = vrot.slane %v227, 5
  %v236 = vrot.slane %v227, 6
  %v245 = vadd.f32 %v85, %v230
  %v246 = vadd.f32 %v88, %v227
  %v247 = vadd.f32 %v91, %v231
  %v248 = vadd.f32 %v94, %v232
  %v249 = vadd.f32 %v97, %v233
  %v250 = vadd.f32 %v100, %v234
  %v251 = vadd.f32 %v103, %v235
  %v252 = vadd.f32 %v106, %v236
  %v253 = vtanh.pop %v245
  %v254 = vtanh.pop %v246
  %v255 = vtanh.pop %v247
  %v256 = vtanh.pop %v248
  %v257 = vtanh.pop %v249
  %v258 = vtanh.pop %v250
  %v259 = vtanh.pop %v251
  %v260 = vtanh.pop %v252
  %vm261 = vcmask 254977
  %262 = vst.msk [vmem:[#allocation2] sm:$0x2] %vm261, %v253
  %263 = vst.msk [vmem:[#allocation2 + $0x8] sm:$0x2] %vm261, %v254
  %264 = vst.msk [vmem:[#allocation2 + $0x10] sm:$0x2] %vm261, %v255
  %265 = vst.msk [vmem:[#allocation2 + $0x18] sm:$0x2] %vm261, %v256
  %266 = vst.msk [vmem:[#allocation2 + $0x20] sm:$0x2] %vm261, %v257
  %267 = vst.msk [vmem:[#allocation2 + $0x28] sm:$0x2] %vm261, %v258
  %268 = vst.msk [vmem:[#allocation2 + $0x30] sm:$0x2] %vm261, %v259
  %269 = vst.msk [vmem:[#allocation2 + $0x38] sm:$0x2] %vm261, %v260
  %v278 = vrot.slane %v253, 1
  %v279 = vsel %vm187, %v254, %v278
  %v280 = vrot.slane %v255, 7
  %v281 = vsel %vm190, %v280, %v279
  %v282 = vrot.slane %v256, 6
  %v283 = vsel %vm193, %v282, %v281
  %v284 = vrot.slane %v257, 5
  %v285 = vsel %vm196, %v284, %v283
  %v286 = vrot.slane %v258, 4
  %v287 = vsel %vm199, %v286, %v285
  %v288 = vrot.slane %v259, 3
  %v289 = vsel %vm202, %v288, %v287
  %v290 = vrot.slane %v260, 2
  %v291 = vsel %vm205, %v290, %v289
  %v292 = vsel %vm113, %v291, 0
  %294 = vmatpush.msra.mxu0 0.0
  %295 = vmatpush.msra.mxu0 0.0
  %296 = vmatpush.msra.mxu0 0.0
  %297 = vmatpush.msra.mxu0 0.0
  %298 = vmatpush.msra.mxu0 0.0
  %299 = vmatpush.msra.mxu0 0.0
  %300 = vmatpush.msra.mxu0 0.0
  %301 = vmatpush.msra.mxu0 0.0
  %302 = vmatpush.msra.mxu0 0.0
  %303 = vmatpush.msra.mxu0 0.0
  %304 = vmatpush.msra.mxu0 0.0
  %305 = vmatpush.msra.mxu0 0.0
  %306 = vmatpush.msra.mxu0 %v111
  %307 = vmatpush.msra.mxu0 %v110
  %308 = vmatpush.msra.mxu0 %v109
  %309 = vmatpush.msra.mxu0 %v108
  %310 = vmatmul.f32.gmra.mxu0 %v292
  %v311 = vpop.f32.mrf.mxu0
  %v312 = vadd.f32 0.0, %v311
  %313 = vdwg.mxu0
  %v315 = vrot.slane %v312, 6
  %v316 = vrot.slane %v312, 7
  %v317 = vrot.slane %v312, 1
  %v318 = vrot.slane %v312, 2
  %v319 = vrot.slane %v312, 3
  %v320 = vrot.slane %v312, 4
  %v321 = vrot.slane %v312, 5
  %v330 = vadd.f32 %v85, %v315
  %v331 = vadd.f32 %v88, %v316
  %v332 = vadd.f32 %v91, %v312
  %v333 = vadd.f32 %v94, %v317
  %v334 = vadd.f32 %v97, %v318
  %v335 = vadd.f32 %v100, %v319
  %v336 = vadd.f32 %v103, %v320
  %v337 = vadd.f32 %v106, %v321
  %v338 = vtanh.pop %v330
  %v339 = vtanh.pop %v331
  %v340 = vtanh.pop %v332
  %v341 = vtanh.pop %v333
  %v342 = vtanh.pop %v334
  %v343 = vtanh.pop %v335
  %v344 = vtanh.pop %v336
  %v345 = vtanh.pop %v337
  %vm346 = vcmask 256002
  %347 = vst.msk [vmem:[#allocation2] sm:$0x4] %vm346, %v338
  %348 = vst.msk [vmem:[#allocation2 + $0x8] sm:$0x4] %vm346, %v339
  %349 = vst.msk [vmem:[#allocation2 + $0x10] sm:$0x4] %vm346, %v340
  %350 = vst.msk [vmem:[#allocation2 + $0x18] sm:$0x4] %vm346, %v341
  %351 = vst.msk [vmem:[#allocation2 + $0x20] sm:$0x4] %vm346, %v342
  %352 = vst.msk [vmem:[#allocation2 + $0x28] sm:$0x4] %vm346, %v343
  %353 = vst.msk [vmem:[#allocation2 + $0x30] sm:$0x4] %vm346, %v344
  %354 = vst.msk [vmem:[#allocation2 + $0x38] sm:$0x4] %vm346, %v345
  %v363 = vrot.slane %v338, 2
  %v364 = vrot.slane %v339, 1
  %v365 = vsel %vm187, %v364, %v363
  %v366 = vsel %vm190, %v340, %v365
  %v367 = vrot.slane %v341, 7
  %v368 = vsel %vm193, %v367, %v366
  %v369 = vrot.slane %v342, 6
  %v370 = vsel %vm196, %v369, %v368
  %v371 = vrot.slane %v343, 5
  %v372 = vsel %vm199, %v371, %v370
  %v373 = vrot.slane %v344, 4
  %v374 = vsel %vm202, %v373, %v372
  %v375 = vrot.slane %v345, 3
  %v376 = vsel %vm205, %v375, %v374
  %v377 = vsel %vm113, %v376, 0
  %379 = vmatpush.msra.mxu0 0.0
  %380 = vmatpush.msra.mxu0 0.0
  %381 = vmatpush.msra.mxu0 0.0
  %382 = vmatpush.msra.mxu0 0.0
  %383 = vmatpush.msra.mxu0 0.0
  %384 = vmatpush.msra.mxu0 0.0
  %385 = vmatpush.msra.mxu0 0.0
  %386 = vmatpush.msra.mxu0 0.0
  %387 = vmatpush.msra.mxu0 0.0
  %388 = vmatpush.msra.mxu0 0.0
  %389 = vmatpush.msra.mxu0 0.0
  %390 = vmatpush.msra.mxu0 0.0
  %391 = vmatpush.msra.mxu0 %v111
  %392 = vmatpush.msra.mxu0 %v110
  %393 = vmatpush.msra.mxu0 %v109
  %394 = vmatpush.msra.mxu0 %v108
  %395 = vmatmul.f32.gmra.mxu0 %v377
  %v396 = vpop.f32.mrf.mxu0
  %v397 = vadd.f32 0.0, %v396
  %398 = vdwg.mxu0
  %v400 = vrot.slane %v397, 5
  %v401 = vrot.slane %v397, 6
  %v402 = vrot.slane %v397, 7
  %v403 = vrot.slane %v397, 1
  %v404 = vrot.slane %v397, 2
  %v405 = vrot.slane %v397, 3
  %v406 = vrot.slane %v397, 4
  %v415 = vadd.f32 %v85, %v400
  %v416 = vadd.f32 %v88, %v401
  %v417 = vadd.f32 %v91, %v402
  %v418 = vadd.f32 %v94, %v397
  %v419 = vadd.f32 %v97, %v403
  %v420 = vadd.f32 %v100, %v404
  %v421 = vadd.f32 %v103, %v405
  %v422 = vadd.f32 %v106, %v406
  %v423 = vtanh.pop %v415
  %v424 = vtanh.pop %v416
  %v425 = vtanh.pop %v417
  %v426 = vtanh.pop %v418
  %v427 = vtanh.pop %v419
  %v428 = vtanh.pop %v420
  %v429 = vtanh.pop %v421
  %v430 = vtanh.pop %v422
  %vm431 = vcmask 257027
  %432 = vst.msk [vmem:[#allocation2] sm:$0x8] %vm431, %v423
  %433 = vst.msk [vmem:[#allocation2 + $0x8] sm:$0x8] %vm431, %v424
  %434 = vst.msk [vmem:[#allocation2 + $0x10] sm:$0x8] %vm431, %v425
  %435 = vst.msk [vmem:[#allocation2 + $0x18] sm:$0x8] %vm431, %v426
  %436 = vst.msk [vmem:[#allocation2 + $0x20] sm:$0x8] %vm431, %v427
  %437 = vst.msk [vmem:[#allocation2 + $0x28] sm:$0x8] %vm431, %v428
  %438 = vst.msk [vmem:[#allocation2 + $0x30] sm:$0x8] %vm431, %v429
  %439 = vst.msk [vmem:[#allocation2 + $0x38] sm:$0x8] %vm431, %v430
  %v448 = vrot.slane %v423, 3
  %v449 = vrot.slane %v424, 2
  %v450 = vsel %vm187, %v449, %v448
  %v451 = vrot.slane %v425, 1
  %v452 = vsel %vm190, %v451, %v450
  %v453 = vsel %vm193, %v426, %v452
  %v454 = vrot.slane %v427, 7
  %v455 = vsel %vm196, %v454, %v453
  %v456 = vrot.slane %v428, 6
  %v457 = vsel %vm199, %v456, %v455
  %v458 = vrot.slane %v429, 5
  %v459 = vsel %vm202, %v458, %v457
  %v460 = vrot.slane %v430, 4
  %v461 = vsel %vm205, %v460, %v459
  %v462 = vsel %vm113, %v461, 0
  %464 = vmatpush.msra.mxu0 0.0
  %465 = vmatpush.msra.mxu0 0.0
  %466 = vmatpush.msra.mxu0 0.0
  %467 = vmatpush.msra.mxu0 0.0
  %468 = vmatpush.msra.mxu0 0.0
  %469 = vmatpush.msra.mxu0 0.0
  %470 = vmatpush.msra.mxu0 0.0
  %471 = vmatpush.msra.mxu0 0.0
  %472 = vmatpush.msra.mxu0 0.0
  %473 = vmatpush.msra.mxu0 0.0
  %474 = vmatpush.msra.mxu0 0.0
  %475 = vmatpush.msra.mxu0 0.0
  %476 = vmatpush.msra.mxu0 %v111
  %477 = vmatpush.msra.mxu0 %v110
  %478 = vmatpush.msra.mxu0 %v109
  %479 = vmatpush.msra.mxu0 %v108
  %480 = vmatmul.f32.gmra.mxu0 %v462
  %v481 = vpop.f32.mrf.mxu0
  %v482 = vadd.f32 0.0, %v481
  %483 = vdwg.mxu0
  %v485 = vrot.slane %v482, 4
  %v486 = vrot.slane %v482, 5
  %v487 = vrot.slane %v482, 6
  %v488 = vrot.slane %v482, 7
  %v489 = vrot.slane %v482, 1
  %v490 = vrot.slane %v482, 2
  %v491 = vrot.slane %v482, 3
  %v500 = vadd.f32 %v85, %v485
  %v501 = vadd.f32 %v88, %v486
  %v502 = vadd.f32 %v91, %v487
  %v503 = vadd.f32 %v94, %v488
  %v504 = vadd.f32 %v97, %v482
  %v505 = vadd.f32 %v100, %v489
  %v506 = vadd.f32 %v103, %v490
  %v507 = vadd.f32 %v106, %v491
  %v508 = vtanh.pop %v500
  %v509 = vtanh.pop %v501
  %v510 = vtanh.pop %v502
  %v511 = vtanh.pop %v503
  %v512 = vtanh.pop %v504
  %v513 = vtanh.pop %v505
  %v514 = vtanh.pop %v506
  %v515 = vtanh.pop %v507
  %vm516 = vcmask 258052
  %517 = vst.msk [vmem:[#allocation2] sm:$0x10] %vm516, %v508
  %518 = vst.msk [vmem:[#allocation2 + $0x8] sm:$0x10] %vm516, %v509
  %519 = vst.msk [vmem:[#allocation2 + $0x10] sm:$0x10] %vm516, %v510
  %520 = vst.msk [vmem:[#allocation2 + $0x18] sm:$0x10] %vm516, %v511
  %521 = vst.msk [vmem:[#allocation2 + $0x20] sm:$0x10] %vm516, %v512
  %522 = vst.msk [vmem:[#allocation2 + $0x28] sm:$0x10] %vm516, %v513
  %523 = vst.msk [vmem:[#allocation2 + $0x30] sm:$0x10] %vm516, %v514
  %524 = vst.msk [vmem:[#allocation2 + $0x38] sm:$0x10] %vm516, %v515
  %v533 = vrot.slane %v508, 4
  %v534 = vrot.slane %v509, 3
  %v535 = vsel %vm187, %v534, %v533
  %v536 = vrot.slane %v510, 2
  %v537 = vsel %vm190, %v536, %v535
  %v538 = vrot.slane %v511, 1
  %v539 = vsel %vm193, %v538, %v537
  %v540 = vsel %vm196, %v512, %v539
  %v541 = vrot.slane %v513, 7
  %v542 = vsel %vm199, %v541, %v540
  %v543 = vrot.slane %v514, 6
  %v544 = vsel %vm202, %v543, %v542
  %v545 = vrot.slane %v515, 5
  %v546 = vsel %vm205, %v545, %v544
  %v547 = vsel %vm113, %v546, 0
  %549 = vmatpush.msra.mxu0 0.0
  %550 = vmatpush.msra.mxu0 0.0
  %551 = vmatpush.msra.mxu0 0.0
  %552 = vmatpush.msra.mxu0 0.0
  %553 = vmatpush.msra.mxu0 0.0
  %554 = vmatpush.msra.mxu0 0.0
  %555 = vmatpush.msra.mxu0 0.0
  %556 = vmatpush.msra.mxu0 0.0
  %557 = vmatpush.msra.mxu0 0.0
  %558 = vmatpush.msra.mxu0 0.0
  %559 = vmatpush.msra.mxu0 0.0
  %560 = vmatpush.msra.mxu0 0.0
  %561 = vmatpush.msra.mxu0 %v111
  %562 = vmatpush.msra.mxu0 %v110
  %563 = vmatpush.msra.mxu0 %v109
  %564 = vmatpush.msra.mxu0 %v108
  %565 = vmatmul.f32.gmra.mxu0 %v547
  %v566 = vpop.f32.mrf.mxu0
  %v567 = vadd.f32 0.0, %v566
  %568 = vdwg.mxu0
  %v570 = vrot.slane %v567, 3
  %v571 = vrot.slane %v567, 4
  %v572 = vrot.slane %v567, 5
  %v573 = vrot.slane %v567, 6
  %v574 = vrot.slane %v567, 7
  %v575 = vrot.slane %v567, 1
  %v576 = vrot.slane %v567, 2
  %v585 = vadd.f32 %v85, %v570
  %v586 = vadd.f32 %v88, %v571
  %v587 = vadd.f32 %v91, %v572
  %v588 = vadd.f32 %v94, %v573
  %v589 = vadd.f32 %v97, %v574
  %v590 = vadd.f32 %v100, %v567
  %v591 = vadd.f32 %v103, %v575
  %v592 = vadd.f32 %v106, %v576
  %v593 = vtanh.pop %v585
  %v594 = vtanh.pop %v586
  %v595 = vtanh.pop %v587
  %v596 = vtanh.pop %v588
  %v597 = vtanh.pop %v589
  %v598 = vtanh.pop %v590
  %v599 = vtanh.pop %v591
  %v600 = vtanh.pop %v592
  %vm601 = vcmask 259077
  %602 = vst.msk [vmem:[#allocation2] sm:$0x20] %vm601, %v593
  %603 = vst.msk [vmem:[#allocation2 + $0x8] sm:$0x20] %vm601, %v594
  %604 = vst.msk [vmem:[#allocation2 + $0x10] sm:$0x20] %vm601, %v595
  %605 = vst.msk [vmem:[#allocation2 + $0x18] sm:$0x20] %vm601, %v596
  %606 = vst.msk [vmem:[#allocation2 + $0x20] sm:$0x20] %vm601, %v597
  %607 = vst.msk [vmem:[#allocation2 + $0x28] sm:$0x20] %vm601, %v598
  %608 = vst.msk [vmem:[#allocation2 + $0x30] sm:$0x20] %vm601, %v599
  %609 = vst.msk [vmem:[#allocation2 + $0x38] sm:$0x20] %vm601, %v600
  %v618 = vrot.slane %v593, 5
  %v619 = vrot.slane %v594, 4
  %v620 = vsel %vm187, %v619, %v618
  %v621 = vrot.slane %v595, 3
  %v622 = vsel %vm190, %v621, %v620
  %v623 = vrot.slane %v596, 2
  %v624 = vsel %vm193, %v623, %v622
  %v625 = vrot.slane %v597, 1
  %v626 = vsel %vm196, %v625, %v624
  %v627 = vsel %vm199, %v598, %v626
  %v628 = vrot.slane %v599, 7
  %v629 = vsel %vm202, %v628, %v627
  %v630 = vrot.slane %v600, 6
  %v631 = vsel %vm205, %v630, %v629
  %v632 = vsel %vm113, %v631, 0
  %634 = vmatpush.msra.mxu0 0.0
  %635 = vmatpush.msra.mxu0 0.0
  %636 = vmatpush.msra.mxu0 0.0
  %637 = vmatpush.msra.mxu0 0.0
  %638 = vmatpush.msra.mxu0 0.0
  %639 = vmatpush.msra.mxu0 0.0
  %640 = vmatpush.msra.mxu0 0.0
  %641 = vmatpush.msra.mxu0 0.0
  %642 = vmatpush.msra.mxu0 0.0
  %643 = vmatpush.msra.mxu0 0.0
  %644 = vmatpush.msra.mxu0 0.0
  %645 = vmatpush.msra.mxu0 0.0
  %646 = vmatpush.msra.mxu0 %v111
  %647 = vmatpush.msra.mxu0 %v110
  %648 = vmatpush.msra.mxu0 %v109
  %649 = vmatpush.msra.mxu0 %v108
  %650 = vmatmul.f32.gmra.mxu0 %v632
  %v651 = vpop.f32.mrf.mxu0
  %v652 = vadd.f32 0.0, %v651
  %653 = vdwg.mxu0
  %v655 = vrot.slane %v652, 2
  %v656 = vrot.slane %v652, 3
  %v657 = vrot.slane %v652, 4
  %v658 = vrot.slane %v652, 5
  %v659 = vrot.slane %v652, 6
  %v660 = vrot.slane %v652, 7
  %v661 = vrot.slane %v652, 1
  %v670 = vadd.f32 %v85, %v655
  %v671 = vadd.f32 %v88, %v656
  %v672 = vadd.f32 %v91, %v657
  %v673 = vadd.f32 %v94, %v658
  %v674 = vadd.f32 %v97, %v659
  %v675 = vadd.f32 %v100, %v660
  %v676 = vadd.f32 %v103, %v652
  %v677 = vadd.f32 %v106, %v661
  %v678 = vtanh.pop %v670
  %v679 = vtanh.pop %v671
  %v680 = vtanh.pop %v672
  %v681 = vtanh.pop %v673
  %v682 = vtanh.pop %v674
  %v683 = vtanh.pop %v675
  %v684 = vtanh.pop %v676
  %v685 = vtanh.pop %v677
  %vm686 = vcmask 260102
  %687 = vst.msk [vmem:[#allocation2] sm:$0x40] %vm686, %v678
  %688 = vst.msk [vmem:[#allocation2 + $0x8] sm:$0x40] %vm686, %v679
  %689 = vst.msk [vmem:[#allocation2 + $0x10] sm:$0x40] %vm686, %v680
  %690 = vst.msk [vmem:[#allocation2 + $0x18] sm:$0x40] %vm686, %v681
  %691 = vst.msk [vmem:[#allocation2 + $0x20] sm:$0x40] %vm686, %v682
  %692 = vst.msk [vmem:[#allocation2 + $0x28] sm:$0x40] %vm686, %v683
  %693 = vst.msk [vmem:[#allocation2 + $0x30] sm:$0x40] %vm686, %v684
  %694 = vst.msk [vmem:[#allocation2 + $0x38] sm:$0x40] %vm686, %v685
  %v703 = vrot.slane %v678, 6
  %v704 = vrot.slane %v679, 5
  %v705 = vsel %vm187, %v704, %v703
  %v706 = vrot.slane %v680, 4
  %v707 = vsel %vm190, %v706, %v705
  %v708 = vrot.slane %v681, 3
  %v709 = vsel %vm193, %v708, %v707
  %v710 = vrot.slane %v682, 2
  %v711 = vsel %vm196, %v710, %v709
  %v712 = vrot.slane %v683, 1
  %v713 = vsel %vm199, %v712, %v711
  %v714 = vsel %vm202, %v684, %v713
  %v715 = vrot.slane %v685, 7
  %v716 = vsel %vm205, %v715, %v714
  %v717 = vsel %vm113, %v716, 0
  %719 = vmatpush.msra.mxu0 0.0
  %720 = vmatpush.msra.mxu0 0.0
  %721 = vmatpush.msra.mxu0 0.0
  %722 = vmatpush.msra.mxu0 0.0
  %723 = vmatpush.msra.mxu0 0.0
  %724 = vmatpush.msra.mxu0 0.0
  %725 = vmatpush.msra.mxu0 0.0
  %726 = vmatpush.msra.mxu0 0.0
  %727 = vmatpush.msra.mxu0 0.0
  %728 = vmatpush.msra.mxu0 0.0
  %729 = vmatpush.msra.mxu0 0.0
  %730 = vmatpush.msra.mxu0 0.0
  %731 = vmatpush.msra.mxu0 %v111
  %732 = vmatpush.msra.mxu0 %v110
  %733 = vmatpush.msra.mxu0 %v109
  %734 = vmatpush.msra.mxu0 %v108
  %735 = vmatmul.f32.gmra.mxu0 %v717
  %v736 = vpop.f32.mrf.mxu0
  %v737 = vadd.f32 0.0, %v736
  %738 = vdwg.mxu0
  %v740 = vrot.slane %v737, 1
  %v741 = vrot.slane %v737, 2
  %v742 = vrot.slane %v737, 3
  %v743 = vrot.slane %v737, 4
  %v744 = vrot.slane %v737, 5
  %v745 = vrot.slane %v737, 6
  %v746 = vrot.slane %v737, 7
  %v755 = vadd.f32 %v85, %v740
  %v756 = vadd.f32 %v88, %v741
  %v757 = vadd.f32 %v91, %v742
  %v758 = vadd.f32 %v94, %v743
  %v759 = vadd.f32 %v97, %v744
  %v760 = vadd.f32 %v100, %v745
  %v761 = vadd.f32 %v103, %v746
  %v762 = vadd.f32 %v106, %v737
  %v763 = vtanh.pop %v755
  %v764 = vtanh.pop %v756
  %v765 = vtanh.pop %v757
  %v766 = vtanh.pop %v758
  %v767 = vtanh.pop %v759
  %v768 = vtanh.pop %v760
  %v769 = vtanh.pop %v761
  %v770 = vtanh.pop %v762
  %vm771 = vcmask 261127
  %772 = vst.msk [vmem:[#allocation2] sm:$0x80] %vm771, %v763
  %773 = vst.msk [vmem:[#allocation2 + $0x8] sm:$0x80] %vm771, %v764
  %774 = vst.msk [vmem:[#allocation2 + $0x10] sm:$0x80] %vm771, %v765
  %775 = vst.msk [vmem:[#allocation2 + $0x18] sm:$0x80] %vm771, %v766
  %776 = vst.msk [vmem:[#allocation2 + $0x20] sm:$0x80] %vm771, %v767
  %777 = vst.msk [vmem:[#allocation2 + $0x28] sm:$0x80] %vm771, %v768
  %778 = vst.msk [vmem:[#allocation2 + $0x30] sm:$0x80] %vm771, %v769
  %779 = vst.msk [vmem:[#allocation2 + $0x38] sm:$0x80] %vm771, %v770
  %v788 = vrot.slane %v764, 7
  %v789 = vrot.slane %v765, 6
  %v790 = vsel %vm187, %v789, %v788
  %v791 = vrot.slane %v766, 5
  %v792 = vsel %vm190, %v791, %v790
  %v793 = vrot.slane %v767, 4
  %v794 = vsel %vm193, %v793, %v792
  %v795 = vrot.slane %v768, 3
  %v796 = vsel %vm196, %v795, %v794
  %v797 = vrot.slane %v769, 2
  %v798 = vsel %vm199, %v797, %v796
  %v799 = vrot.slane %v770, 1
  %v800 = vsel %vm202, %v799, %v798
  %803 = vst.msk [vmem:[%s8 - $0x7] sm:$0x80] %vm771, %v763
  %vm804 = vcmask 260096
  %805 = vst.msk [vmem:[%s8 + $0x1] sm:$0x7f] %vm804, %v800
  %v806 = vld [vmem:[#allocation2] sm:$0xff]
  %v807 = vld [vmem:[#allocation2 + $0x8] sm:$0xff]
  %v808 = vld [vmem:[#allocation2 + $0x10] sm:$0xff]
  %v809 = vld [vmem:[#allocation2 + $0x18] sm:$0xff]
  %v810 = vld [vmem:[#allocation2 + $0x20] sm:$0xff]
  %v811 = vld [vmem:[#allocation2 + $0x28] sm:$0xff]
  %v812 = vld [vmem:[#allocation2 + $0x30] sm:$0xff]
  %v813 = vld [vmem:[#allocation2 + $0x38] sm:$0xff]
  %v814 = vld [vmem:[%s5] sm:$0xff]
  %v815 = vld [vmem:[%s5 + $0x8] sm:$0xff]
  %v816 = vld [vmem:[%s5 + $0x10] sm:$0xff]
  %v817 = vld [vmem:[%s5 + $0x18] sm:$0xff]
  %v818 = vld [vmem:[%s6] sm:$0x1]
  %v820 = vperm.slane %v818, 0
  %v823 = vsel %vm113, %v806, 0
  %v826 = vsel %vm113, %v807, 0
  %v829 = vsel %vm113, %v808, 0
  %v832 = vsel %vm113, %v809, 0
  %v835 = vsel %vm113, %v810, 0
  %v838 = vsel %vm113, %v811, 0
  %v841 = vsel %vm113, %v812, 0
  %v844 = vsel %vm113, %v813, 0
  %846 = vmatpush.msra.mxu0 0.0
  %847 = vmatpush.msra.mxu0 0.0
  %848 = vmatpush.msra.mxu0 0.0
  %849 = vmatpush.msra.mxu0 0.0
  %850 = vmatpush.msra.mxu0 0.0
  %851 = vmatpush.msra.mxu0 0.0
  %852 = vmatpush.msra.mxu0 0.0
  %853 = vmatpush.msra.mxu0 0.0
  %854 = vmatpush.msra.mxu0 0.0
  %855 = vmatpush.msra.mxu0 0.0
  %856 = vmatpush.msra.mxu0 0.0
  %857 = vmatpush.msra.mxu0 0.0
  %858 = vmatpush.msra.mxu0 %v817
  %859 = vmatpush.msra.mxu0 %v816
  %860 = vmatpush.msra.mxu0 %v815
  %861 = vmatpush.msra.mxu0 %v814
  %862 = vmatmul.f32.gmra.mxu0 %v823
  %v863 = vpop.f32.mrf.mxu0
  %v864 = vadd.f32 %v820, %v863
  %865 = vmatmul.f32.gmra.mxu0 %v826
  %v866 = vpop.f32.mrf.mxu0
  %v867 = vadd.f32 %v820, %v866
  %868 = vmatmul.f32.gmra.mxu0 %v829
  %v869 = vpop.f32.mrf.mxu0
  %v870 = vadd.f32 %v820, %v869
  %871 = vmatmul.f32.gmra.mxu0 %v832
  %v872 = vpop.f32.mrf.mxu0
  %v873 = vadd.f32 %v820, %v872
  %874 = vmatmul.f32.gmra.mxu0 %v835
  %v875 = vpop.f32.mrf.mxu0
  %v876 = vadd.f32 %v820, %v875
  %877 = vmatmul.f32.gmra.mxu0 %v838
  %v878 = vpop.f32.mrf.mxu0
  %v879 = vadd.f32 %v820, %v878
  %880 = vmatmul.f32.gmra.mxu0 %v841
  %v881 = vpop.f32.mrf.mxu0
  %v882 = vadd.f32 %v820, %v881
  %883 = vmatmul.f32.gmra.mxu0 %v844
  %v884 = vpop.f32.mrf.mxu0
  %v885 = vadd.f32 %v820, %v884
  %886 = vdwg.mxu0
  %887 = vst.msk [vmem:[%s7] sm:$0xff] %vm42, %v864
  %888 = vst.msk [vmem:[%s7 + $0x8] sm:$0xff] %vm42, %v867
  %889 = vst.msk [vmem:[%s7 + $0x10] sm:$0xff] %vm42, %v870
  %890 = vst.msk [vmem:[%s7 + $0x18] sm:$0xff] %vm42, %v873
  %891 = vst.msk [vmem:[%s7 + $0x20] sm:$0xff] %vm42, %v876
  %892 = vst.msk [vmem:[%s7 + $0x28] sm:$0xff] %vm42, %v879
  %893 = vst.msk [vmem:[%s7 + $0x30] sm:$0xff] %vm42, %v882
  %894 = vst.msk [vmem:[%s7 + $0x38] sm:$0xff] %vm42, %v885
  // Predicated region
  $region30: #{char_rnn_forward.1} parent=0 // pred_check
    _
  $region31: #{char_rnn_forward.1} parent=0 // pred_check_branch
    %896 = sbr.rel (0) target = $region33
  $region32: #{char_rnn_forward.1} parent=0 // pred_region
    _
  $region33: #{char_rnn_forward.1} parent=0 // pred_fallthru
    _
  // Predicated region
  $region34: #{char_rnn_forward.1} parent=0 // pred_check
    _
  $region35: #{char_rnn_forward.1} parent=0 // pred_check_branch
    %898 = sbr.rel (0) target = $region37
  $region36: #{char_rnn_forward.1} parent=0 // pred_region
    _
  $region37: #{char_rnn_forward.1} parent=0 // pred_fallthru
    _
  // Predicated region
  $region38: #{char_rnn_forward.1} parent=0 // pred_check
    _
  $region39: #{char_rnn_forward.1} parent=0 // pred_check_branch
    %900 = sbr.rel (0) target = $region41
  $region40: #{char_rnn_forward.1} parent=0 // pred_region
    _
  $region41: #{char_rnn_forward.1} parent=0 // pred_fallthru
    _
  // Predicated region
  $region42: #{char_rnn_forward.1} parent=0 // pred_check
    _
  $region43: #{char_rnn_forward.1} parent=0 // pred_check_branch
    %902 = sbr.rel (0) target = $region45
  $region44: #{char_rnn_forward.1} parent=0 // pred_region
    _
  $region45: #{char_rnn_forward.1} parent=0 // pred_fallthru
    _

</llo_original>
